<compile_context>
chip_gen: v5e
topology: v5e:2x2
jax: 0.10.0
libtpu: 0.0.40
codegen_flags: <defaults>
</compile_context>

<pallas_src>
import functools

import jax
import jax.numpy as jnp
from jax import lax
from jax.experimental import pallas as pl
from jax.experimental.pallas import tpu as pltpu


_VMEM_BUDGET_BYTES = 8 << 20      # explicit working-set budget (well under scoped VMEM on v5e..v7x)
_TB_CAP = 256                     # max instances per grid step
_ONEHOT_MAX_C = 16                # C <= this: auto-pipelined one-hot select; larger: manual gather


def _round_up(x, m):
    return (x + m - 1) // m * m


def _pick_tb(n_rows, per_row_bytes):
    """Largest batch tile (multiple of 8, <= 256, <= whole batch) fitting the VMEM budget."""
    tb = min(_TB_CAP, _VMEM_BUDGET_BYTES // max(per_row_bytes, 1), _round_up(n_rows, 8))
    return max(8, (tb // 8) * 8)


def _bce_with_logits(x, y):
    # Numerically-stable BCE-with-logits (same formula torch uses):
    #   max(x, 0) - x*y + log(1 + exp(-|x|))
    return jnp.maximum(x, 0.0) - x * y + jnp.log1p(jnp.exp(-jnp.abs(x)))


# ---------------------------------------------------------------------------
# Manual HBM row-gather helpers (large-C path)
# ---------------------------------------------------------------------------
def _start_row_gather(cls_ref, logits_hbm, gbuf, sem, block_idx, dst_slot, tb, n_valid):
    """Issue tb per-row class-channel gathers HBM->VMEM, all signalling one semaphore."""
    base = block_idx * tb

    def body(t, carry):
        row = jnp.minimum(base + t, n_valid - 1)     # clamp padded rows in-bounds
        c = cls_ref[row]                             # scalar-prefetched class id (SMEM)
        pltpu.make_async_copy(
            logits_hbm.at[row, pl.ds(c, 1), :],      # (1, HW) gathered class channel
            gbuf.at[dst_slot, pl.ds(t, 1), :],
            sem.at[dst_slot],
        ).start()
        return carry

    lax.fori_loop(0, tb, body, 0, unroll=8)


def _wait_row_gather(gbuf, sem, slot):
    # Single aggregated wait: each row copy incremented sem[slot] by its byte count, so one
    # wait sized for the full (tb, HW) slab retires all tb copies at once.
    pltpu.make_async_copy(gbuf.at[slot], gbuf.at[slot], sem.at[slot]).wait()


# ---------------------------------------------------------------------------
# Training path: mask_rcnn_loss
#   mean over (B, H, W) of binary_cross_entropy_with_logits(logits[b, cls[b]], gt[b])
# ---------------------------------------------------------------------------
def _loss_onehot_kernel(logits_ref, onehot_ref, gt_ref, out_ref, acc_ref, *,
                        tb, n_valid, inv_total, masked):
    i = pl.program_id(0)

    @pl.when(i == 0)
    def _():
        acc_ref[...] = jnp.zeros_like(acc_ref)

    # Select the per-instance class channel: (tb, C, HW) * (tb, C, 1) summed over C (VPU+XLU).
    x = jnp.sum(logits_ref[...].astype(jnp.float32) * onehot_ref[...], axis=1)   # (tb, HW)
    y = gt_ref[...].astype(jnp.float32)
    loss = _bce_with_logits(x, y)
    if masked:
        rows = i * tb + lax.broadcasted_iota(jnp.int32, (tb, 1), 0)
        loss = jnp.where(rows < n_valid, loss, 0.0)
    acc_ref[...] += loss                               # VPU-only vector accumulate

    @pl.when(i == pl.num_programs(0) - 1)
    def _():
        out_ref[...] = jnp.sum(acc_ref[...], keepdims=True) * inv_total


def _loss_gather_kernel(cls_ref, logits_hbm, gt_ref, out_ref,
                        gbuf, sem, acc_ref, *, tb, n_valid, inv_total, masked):
    i = pl.program_id(0)
    nb = pl.num_programs(0)
    slot = i % 2

    @pl.when(i == 0)
    def _():
        acc_ref[...] = jnp.zeros_like(acc_ref)
        _start_row_gather(cls_ref, logits_hbm, gbuf, sem, 0, 0, tb, n_valid)       # prime slot 0

    @pl.when(i + 1 < nb)
    def _():
        _start_row_gather(cls_ref, logits_hbm, gbuf, sem, i + 1, 1 - slot, tb, n_valid)

    _wait_row_gather(gbuf, sem, slot)

    x = gbuf[slot].astype(jnp.float32)                 # (tb, HW) gathered logits
    y = gt_ref[...].astype(jnp.float32)
    loss = _bce_with_logits(x, y)
    if masked:
        rows = i * tb + lax.broadcasted_iota(jnp.int32, (tb, 1), 0)
        loss = jnp.where(rows < n_valid, loss, 0.0)
    acc_ref[...] += loss

    @pl.when(i == nb - 1)
    def _():
        out_ref[...] = jnp.sum(acc_ref[...], keepdims=True) * inv_total


def mask_rcnn_loss_pallas(pred_mask_logits, gt_classes, gt_masks, tb=None):
    """Scalar mean BCE-with-logits over per-class gathered mask logits."""
    B, C, H, W = pred_mask_logits.shape
    if B == 0:
        return jnp.sum(pred_mask_logits) * 0.0
    HW = H * W
    HWp = _round_up(HW, 128)
    Cp = _round_up(C, 8)
    isz = pred_mask_logits.dtype.itemsize
    inv_total = 1.0 / float(B * H * W)

    logits2d = pred_mask_logits.reshape(B, C, HW)      # lane-dense last dim
    gt2d = gt_masks.reshape(B, HW).astype(pred_mask_logits.dtype)
    if C == 1:                                         # class-agnostic masks -> channel 0
        cls = jnp.zeros((B,), jnp.int32)
    else:
        cls = jnp.clip(gt_classes.astype(jnp.int32), 0, C - 1)

    use_gather = C > _ONEHOT_MAX_C

    if use_gather:
        # --- large C: manual HBM gather of one class channel per instance -----------------
        if tb is None:
            per_row = 2 * HWp * isz + 2 * HWp * isz + 4 * HWp   # gather slab x2 + gt x2 + acc
            tb = _pick_tb(B, per_row)
        b_pad = _round_up(B, tb)
        nb = b_pad // tb
        if b_pad != B:
            gt2d = jnp.pad(gt2d, ((0, b_pad - B), (0, 0)))

        kernel = functools.partial(_loss_gather_kernel, tb=tb, n_valid=B,
                                   inv_total=inv_total, masked=(b_pad != B))
        out = pl.pallas_call(
            kernel,
            out_shape=jax.ShapeDtypeStruct((1, 1), jnp.float32),
            grid_spec=pltpu.PrefetchScalarGridSpec(
                num_scalar_prefetch=1,
                grid=(nb,),
                in_specs=[
                    pl.BlockSpec(memory_space=pl.ANY),               # logits stay in HBM
                    pl.BlockSpec((tb, HW), lambda i, cls: (i, 0)),   # gt masks, auto-pipelined
                ],
                out_specs=pl.BlockSpec((1, 1), lambda i, cls: (0, 0)),
                scratch_shapes=[
                    pltpu.VMEM((2, tb, HW), pred_mask_logits.dtype), # double-buffered gather slab
                    pltpu.SemaphoreType.DMA((2,)),                   # one sem per slot
                    pltpu.VMEM((tb, HW), jnp.float32),               # vector loss accumulator
                ],
            ),
            # Must be "arbitrary": resident accumulator + cross-step prefetch chain.
            compiler_params=pltpu.CompilerParams(dimension_semantics=("arbitrary",)),
        )(cls, logits2d, gt2d)
    else:
        # --- small C: auto-pipelined (tb, C, HW) block + one-hot select (no manual DMA) ----
        onehot = jax.nn.one_hot(cls, C, dtype=jnp.float32)[:, :, None]   # (B, C, 1)
        if tb is None:
            per_row = (2 * Cp * HWp * isz + 2 * Cp * 128 * 4
                       + 2 * HWp * isz + 4 * HWp)
            tb = _pick_tb(B, per_row)
        b_pad = _round_up(B, tb)
        nb = b_pad // tb
        if b_pad != B:
            logits2d = jnp.pad(logits2d, ((0, b_pad - B), (0, 0), (0, 0)))
            onehot = jnp.pad(onehot, ((0, b_pad - B), (0, 0), (0, 0)))
            gt2d = jnp.pad(gt2d, ((0, b_pad - B), (0, 0)))

        kernel = functools.partial(_loss_onehot_kernel, tb=tb, n_valid=B,
                                   inv_total=inv_total, masked=(b_pad != B))
        out = pl.pallas_call(
            kernel,
            out_shape=jax.ShapeDtypeStruct((1, 1), jnp.float32),
            grid_spec=pltpu.PrefetchScalarGridSpec(
                num_scalar_prefetch=0,
                grid=(nb,),
                in_specs=[
                    pl.BlockSpec((tb, C, HW), lambda i: (i, 0, 0)),
                    pl.BlockSpec((tb, C, 1), lambda i: (i, 0, 0)),
                    pl.BlockSpec((tb, HW), lambda i: (i, 0)),
                ],
                out_specs=pl.BlockSpec((1, 1), lambda i: (0, 0)),
                scratch_shapes=[pltpu.VMEM((tb, HW), jnp.float32)],
            ),
            compiler_params=pltpu.CompilerParams(dimension_semantics=("arbitrary",)),
        )(logits2d, onehot, gt2d)
    return out[0, 0]


# ---------------------------------------------------------------------------
# Inference path: mask_rcnn_inference
#   pred_masks[b] = sigmoid(logits[b, pred_classes[b]])  -> (B, 1, H, W)
# ---------------------------------------------------------------------------
def _infer_onehot_kernel(logits_ref, onehot_ref, out_ref):
    x = jnp.sum(logits_ref[...].astype(jnp.float32) * onehot_ref[...], axis=1)   # (tb, HW)
    out_ref[...] = jax.nn.sigmoid(x).astype(out_ref.dtype)


def _infer_gather_kernel(cls_ref, logits_hbm, out_ref, gbuf, sem, *, tb, n_valid):
    i = pl.program_id(0)
    nb = pl.num_programs(0)
    slot = i % 2

    @pl.when(i == 0)
    def _():
        _start_row_gather(cls_ref, logits_hbm, gbuf, sem, 0, 0, tb, n_valid)       # prime slot 0

    @pl.when(i + 1 < nb)
    def _():
        _start_row_gather(cls_ref, logits_hbm, gbuf, sem, i + 1, 1 - slot, tb, n_valid)

    _wait_row_gather(gbuf, sem, slot)
    x = gbuf[slot].astype(jnp.float32)                 # f32 math (v5e has no bf16 VPU/EUP)
    out_ref[...] = jax.nn.sigmoid(x).astype(out_ref.dtype)


def mask_rcnn_inference_pallas(pred_mask_logits, pred_classes, tb=None):
    B, C, H, W = pred_mask_logits.shape
    HW = H * W
    if B == 0:
        return jnp.zeros((0, 1, H, W), pred_mask_logits.dtype)
    HWp = _round_up(HW, 128)
    Cp = _round_up(C, 8)
    isz = pred_mask_logits.dtype.itemsize

    logits2d = pred_mask_logits.reshape(B, C, HW)
    if C == 1:                                         # class-agnostic: only channel 0
        cls = jnp.zeros((B,), jnp.int32)
    else:
        cls = jnp.clip(pred_classes.astype(jnp.int32), 0, C - 1)

    use_gather = C > _ONEHOT_MAX_C

    if use_gather:
        # --- large C: double-buffered manual gather with cross-step prefetch ("arbitrary") --
        if tb is None:
            per_row = 2 * HWp * isz + 2 * HWp * isz
            tb = _pick_tb(B, per_row)
        b_pad = _round_up(B, tb)
        nb = b_pad // tb

        kernel = functools.partial(_infer_gather_kernel, tb=tb, n_valid=B)
        out = pl.pallas_call(
            kernel,
            out_shape=jax.ShapeDtypeStruct((b_pad, HW), pred_mask_logits.dtype),
            grid_spec=pltpu.PrefetchScalarGridSpec(
                num_scalar_prefetch=1,
                grid=(nb,),
                in_specs=[pl.BlockSpec(memory_space=pl.ANY)],
                out_specs=pl.BlockSpec((tb, HW), lambda i, cls: (i, 0)),  # lane-dense output
                scratch_shapes=[
                    pltpu.VMEM((2, tb, HW), pred_mask_logits.dtype),
                    pltpu.SemaphoreType.DMA((2,)),
                ],
            ),
            # "arbitrary": cross-step prefetch chain shares buffer slots/semaphores.
            compiler_params=pltpu.CompilerParams(dimension_semantics=("arbitrary",)),
        )(cls, logits2d)
    else:
        # --- small C: fully auto-pipelined one-hot select + sigmoid ("parallel" batch axis) --
        onehot = jax.nn.one_hot(cls, C, dtype=jnp.float32)[:, :, None]   # (B, C, 1)
        if tb is None:
            per_row = 2 * Cp * HWp * isz + 2 * Cp * 128 * 4 + 2 * HWp * isz
            tb = _pick_tb(B, per_row)
            # Keep >= 2 grid steps when possible so the "parallel" axis spans both
            # TensorCores on v7x.
            tb = min(tb, max(8, _round_up((B + 1) // 2, 8)))
        b_pad = _round_up(B, tb)
        nb = b_pad // tb
        if b_pad != B:
            logits2d = jnp.pad(logits2d, ((0, b_pad - B), (0, 0), (0, 0)))
            onehot = jnp.pad(onehot, ((0, b_pad - B), (0, 0), (0, 0)))

        out = pl.pallas_call(
            _infer_onehot_kernel,
            out_shape=jax.ShapeDtypeStruct((b_pad, HW), pred_mask_logits.dtype),
            grid_spec=pltpu.PrefetchScalarGridSpec(
                num_scalar_prefetch=0,
                grid=(nb,),
                in_specs=[
                    pl.BlockSpec((tb, C, HW), lambda i: (i, 0, 0)),
                    pl.BlockSpec((tb, C, 1), lambda i: (i, 0, 0)),
                ],
                out_specs=pl.BlockSpec((tb, HW), lambda i: (i, 0)),
            ),
            compiler_params=pltpu.CompilerParams(dimension_semantics=("parallel",)),
        )(logits2d, onehot)
    # Layout plumbing back to the module's (B, 1, Hmask, Wmask) contract.
    return out[:B].reshape(B, 1, H, W)


# ---------------------------------------------------------------------------
# Module wrapper mirroring BaseMaskRCNNHead.forward
# ---------------------------------------------------------------------------
class BaseMaskRCNNHeadPallas:
    def __init__(self, vis_period=0, manual_reweight=False, loss_weight=1.0):
        self.vis_period = vis_period
        self.manual_reweight = manual_reweight
        self.loss_weight = loss_weight
        self.training = True
        # TODO(synk): manual_reweight (gt_abns reweighting), event-storage accuracy/FP/FN
        # logging, visualization, and gt_masks crop_and_resize are host/dataset-side
        # bookkeeping and are not ported.

    def layers(self, x):
        # TODO(synk): BaseMaskRCNNHead.layers is abstract (raises NotImplementedError in the
        # reference); treated as identity so x is already the (B, C, Hmask, Wmask) logits.
        return x

    def forward(self, x, classes, gt_masks=None):
        x = self.layers(x)
        if self.training:
            loss = mask_rcnn_loss_pallas(x, classes, gt_masks)
            return {"loss_mask": loss * self.loss_weight}
        else:
            return mask_rcnn_inference_pallas(x, classes)


if __name__ == "__main__":
    key = jax.random.PRNGKey(0)
    k1, k2, k3, k4, k5, k6 = jax.random.split(key, 6)
    head = BaseMaskRCNNHeadPallas()

    def ref_loss_fn(logits, cls, gt):
        g = logits[jnp.arange(logits.shape[0]), cls]
        return jnp.mean(jnp.maximum(g, 0.0) - g * gt + jnp.log1p(jnp.exp(-jnp.abs(g))))

    def ref_probs_fn(logits, cls):
        return jax.nn.sigmoid(logits[jnp.arange(logits.shape[0]), cls])[:, None]

    # ---- Case 1: small C -> auto-pipelined one-hot select path -------------------------
    # B deliberately not a multiple of 8 to exercise padding/masking.
    B, C, H, W = 10, 4, 16, 16
    logits = jax.random.normal(k1, (B, C, H, W), dtype=jnp.float32)
    classes = jax.random.randint(k2, (B,), 0, C, dtype=jnp.int32)
    gt_masks = (jax.random.uniform(k3, (B, H, W)) > 0.5).astype(jnp.float32)

    head.training = True
    loss = jax.block_until_ready(head.forward(logits, classes, gt_masks)["loss_mask"])
    head.training = False
    probs = jax.block_until_ready(head.forward(logits, classes))

    assert probs.shape == (B, 1, H, W)
    assert jnp.allclose(loss, ref_loss_fn(logits, classes, gt_masks), atol=1e-5, rtol=1e-5)
    assert jnp.allclose(probs, ref_probs_fn(logits, classes), atol=1e-5, rtol=1e-5)

    # ---- Case 2: large C -> manual HBM gather path --------------------------------------
    # Small tb forces several grid steps to exercise the cross-step prefetch chain and the
    # aggregated single-wait per slot.
    B2, C2 = 20, 24
    logits2 = jax.random.normal(k4, (B2, C2, H, W), dtype=jnp.float32)
    classes2 = jax.random.randint(k5, (B2,), 0, C2, dtype=jnp.int32)
    gt_masks2 = (jax.random.uniform(k6, (B2, H, W)) > 0.5).astype(jnp.float32)

    loss2 = jax.block_until_ready(mask_rcnn_loss_pallas(logits2, classes2, gt_masks2, tb=8))
    probs2 = jax.block_until_ready(mask_rcnn_inference_pallas(logits2, classes2, tb=8))

    assert probs2.shape == (B2, 1, H, W)
    assert jnp.allclose(loss2, ref_loss_fn(logits2, classes2, gt_masks2), atol=1e-5, rtol=1e-5)
    assert jnp.allclose(probs2, ref_probs_fn(logits2, classes2), atol=1e-5, rtol=1e-5)

    print("KERNEL_OK")
</pallas_src>

<mosaic_0001>
module attributes {stable_mosaic.version = 11 : i64} {
  func.func @_loss_onehot_kernel(%arg0: i32, %arg1: memref<16x4x256xf32, #tpu.memory_space<vmem>>, %arg2: memref<16x4x1xf32, #tpu.memory_space<vmem>>, %arg3: memref<16x256xf32, #tpu.memory_space<vmem>>, %arg4: memref<1x1xf32, #tpu.memory_space<vmem>>, %arg5: memref<16x256xf32, #tpu.memory_space<vmem>>) attributes {dimension_semantics = [#tpu.dimension_semantics<arbitrary>], iteration_bounds = array<i64: 1>, scalar_prefetch = 0 : i64, scratch_operands = 1 : i64, tpu.core_type = #tpu.core_type<tc>, window_params = [{transform_indices = @transform_0, window_bounds = array<i64: 16, 4, 256>}, {transform_indices = @transform_1, window_bounds = array<i64: 16, 4, 1>}, {transform_indices = @transform_2, window_bounds = array<i64: 16, 256>}, {pipeline_mode = #tpu.pipeline_mode<synchronous>, transform_indices = @transform_3, window_bounds = array<i64: 1, 1>}]} {
    %c0_i32 = arith.constant 0 : i32
    %0 = arith.cmpi eq, %arg0, %c0_i32 : i32
    %1 = arith.extui %0 : i1 to i32
    %c0_i32_0 = arith.constant 0 : i32
    %2 = arith.cmpi ne, %1, %c0_i32_0 : i32
    scf.if %2 {
      %cst_17 = arith.constant 0.000000e+00 : f32
      %35 = vector.broadcast %cst_17 : f32 to vector<16x256xf32>
      %c0_18 = arith.constant 0 : index
      %c0_19 = arith.constant 0 : index
      %36 = vector.load %arg5[%c0_18, %c0_19] : memref<16x256xf32, #tpu.memory_space<vmem>>, vector<16x256xf32>
      tpu.vector_store %arg5[%c0_18, %c0_19], %35 {strides = array<i32>} : memref<16x256xf32, #tpu.memory_space<vmem>>, vector<16x256xf32>,
    } else {
    }
    %c0 = arith.constant 0 : index
    %c0_1 = arith.constant 0 : index
    %c0_2 = arith.constant 0 : index
    %3 = vector.load %arg1[%c0, %c0_1, %c0_2] : memref<16x4x256xf32, #tpu.memory_space<vmem>>, vector<16x4x256xf32>
    %c0_3 = arith.constant 0 : index
    %c0_4 = arith.constant 0 : index
    %c0_5 = arith.constant 0 : index
    %4 = vector.load %arg2[%c0_3, %c0_4, %c0_5] : memref<16x4x1xf32, #tpu.memory_space<vmem>>, vector<16x4x1xf32>
    %5 = vector.broadcast %4 : vector<16x4x1xf32> to vector<16x4x256xf32>
    %6 = arith.mulf %3, %5 : vector<16x4x256xf32>
    %cst = arith.constant dense<0.000000e+00> : vector<16x256xf32>
    %7 = vector.multi_reduction <add>, %6, %cst [1] : vector<16x4x256xf32> to vector<16x256xf32>
    %c0_6 = arith.constant 0 : index
    %c0_7 = arith.constant 0 : index
    %8 = vector.load %arg3[%c0_6, %c0_7] : memref<16x256xf32, #tpu.memory_space<vmem>>, vector<16x256xf32>
    %cst_8 = arith.constant 0.000000e+00 : f32
    %9 = vector.broadcast %cst_8 : f32 to vector<16x256xf32>
    %10 = arith.maximumf %7, %9 : vector<16x256xf32>
    %11 = arith.mulf %7, %8 : vector<16x256xf32>
    %12 = arith.subf %10, %11 : vector<16x256xf32>
    %13 = math.absf %7 : vector<16x256xf32>
    %cst_9 = arith.constant 0.000000e+00 : f32
    %14 = vector.broadcast %cst_9 : f32 to vector<16x256xf32>
    %15 = arith.subf %14, %13 : vector<16x256xf32>
    %16 = math.exp %15 : vector<16x256xf32>
    %17 = math.log1p %16 : vector<16x256xf32>
    %18 = arith.addf %12, %17 : vector<16x256xf32>
    %c16_i32 = arith.constant 16 : i32
    %19 = arith.muli %arg0, %c16_i32 : i32
    %20 = tpu.iota {dimensions = array<i32: 0>} : vector<16x1xi32>
    %21 = vector.broadcast %19 : i32 to vector<16x1xi32>
    %22 = arith.addi %21, %20 : vector<16x1xi32>
    %c10_i32 = arith.constant 10 : i32
    %23 = vector.broadcast %c10_i32 : i32 to vector<16x1xi32>
    %24 = arith.cmpi slt, %22, %23 : vector<16x1xi32>
    %cst_10 = arith.constant 0.000000e+00 : f32
    %25 = vector.shape_cast %24 : vector<16x1xi1> to vector<16x1xi1>
    %26 = vector.broadcast %25 : vector<16x1xi1> to vector<16x256xi1>
    %27 = vector.broadcast %cst_10 : f32 to vector<16x256xf32>
    %28 = arith.select %26, %18, %27 : vector<16x256xi1>, vector<16x256xf32>
    %c0_11 = arith.constant 0 : index
    %c0_12 = arith.constant 0 : index
    %29 = vector.load %arg5[%c0_11, %c0_12] : memref<16x256xf32, #tpu.memory_space<vmem>>, vector<16x256xf32>
    %30 = arith.addf %29, %28 : vector<16x256xf32>
    %c0_13 = arith.constant 0 : index
    %c0_14 = arith.constant 0 : index
    %31 = vector.load %arg5[%c0_13, %c0_14] : memref<16x256xf32, #tpu.memory_space<vmem>>, vector<16x256xf32>
    tpu.vector_store %arg5[%c0_13, %c0_14], %30 {strides = array<i32>} : memref<16x256xf32, #tpu.memory_space<vmem>>, vector<16x256xf32>,
    %c0_i32_15 = arith.constant 0 : i32
    %32 = arith.cmpi eq, %arg0, %c0_i32_15 : i32
    %33 = arith.extui %32 : i1 to i32
    %c0_i32_16 = arith.constant 0 : i32
    %34 = arith.cmpi ne, %33, %c0_i32_16 : i32
    scf.if %34 {
      %c0_17 = arith.constant 0 : index
      %c0_18 = arith.constant 0 : index
      %35 = vector.load %arg5[%c0_17, %c0_18] : memref<16x256xf32, #tpu.memory_space<vmem>>, vector<16x256xf32>
      %36 = vector.shape_cast %35 : vector<16x256xf32> to vector<1x16x256xf32>
      %cst_19 = arith.constant dense<0.000000e+00> : vector<1xf32>
      %37 = vector.multi_reduction <add>, %36, %cst_19 [1, 2] : vector<1x16x256xf32> to vector<1xf32>
      %38 = vector.shape_cast %37 : vector<1xf32> to vector<1x1x1xf32>
      %39 = vector.extract %38[0, 0, 0] : f32 from vector<1x1x1xf32>
      %40 = vector.broadcast %39 : f32 to vector<1x1xf32>
      %cst_20 = arith.constant 3.906250e-04 : f32
      %41 = vector.broadcast %cst_20 : f32 to vector<1x1xf32>
      %42 = arith.mulf %40, %41 : vector<1x1xf32>
      %c0_21 = arith.constant 0 : index
      %c0_22 = arith.constant 0 : index
      %43 = vector.load %arg4[%c0_21, %c0_22] : memref<1x1xf32, #tpu.memory_space<vmem>>, vector<1x1xf32>
      tpu.vector_store %arg4[%c0_21, %c0_22], %42 {strides = array<i32>} : memref<1x1xf32, #tpu.memory_space<vmem>>, vector<1x1xf32>,
    } else {
    }
    return
  }
  func.func @transform_0(%arg0: i32) -> (i32, i32, i32) {
    %c0_i32 = arith.constant 0 : i32
    %c0_i32_0 = arith.constant 0 : i32
    %c0_i32_1 = arith.constant 0 : i32
    return %arg0, %c0_i32, %c0_i32_0 : i32, i32, i32
  }
  func.func @transform_1(%arg0: i32) -> (i32, i32, i32) {
    %c0_i32 = arith.constant 0 : i32
    %c0_i32_0 = arith.constant 0 : i32
    %c0_i32_1 = arith.constant 0 : i32
    return %arg0, %c0_i32, %c0_i32_0 : i32, i32, i32
  }
  func.func @transform_2(%arg0: i32) -> (i32, i32) {
    %c0_i32 = arith.constant 0 : i32
    %c0_i32_0 = arith.constant 0 : i32
    return %arg0, %c0_i32 : i32, i32
  }
  func.func @transform_3(%arg0: i32) -> (i32, i32) {
    %c0_i32 = arith.constant 0 : i32
    %c0_i32_0 = arith.constant 0 : i32
    %c0_i32_1 = arith.constant 0 : i32
    return %c0_i32, %c0_i32_0 : i32, i32
  }
}

</mosaic_0001>

<llo_original>
// kernel: tpu_custom_call.1
$region0: #{tpu_custom_call.1}
  #allocation0 [shape = 'u32[]', space=smem, size = 0x4, offset = 0x4, fixed_abs, tag = 'smem constant byte address 0x4 - core index']
  #allocation1 [shape = 'u32[72,128]{1,0:T(1,128)}', space=vmem, size = 0x9000, scoped, tag = 'internal scratch']
  #allocation2 [shape = 'f32[16,256]{1,0:T(8,128)}', space=vmem, size = 0x4000, scoped, tag = 'scratch operand']
  %s0 = inlined_call_operand.hbm [shape: f32[16,4,256], index: 0, kind: input, shape index: {}]
  %s1 = inlined_call_operand.vmem [shape: f32[16,4,1], index: 1, kind: input, shape index: {}]
  %s2 = inlined_call_operand.vmem [shape: f32[16,256], index: 2, kind: input, shape index: {}]
  %s3 = inlined_call_operand.hbm [shape: f32[1,1], index: 3, kind: output, shape index: {}]
  %s4 = sld [smem:[#allocation0]]
  $region34: #{tpu_custom_call.1} parent=0
    _
  %s6 = ssub.s32 1, %s4
  %s7 = scalar_select 0, %s6, %s4
  $region1: #{tpu_custom_call.1} parent=0
    #allocation3 [shape = 'u8[65536]{0}', space=vmem, size = 0x10000, scoped, tag = 'input window, operand 0, single buffered']
    #allocation4 [shape = 's32[1]{0}', space=sflag, size = 0x4, scoped, tag = 'scoped memory for tpu_custom_call.1']
    #allocation5 [shape = 's32[1]{0}', space=sflag, size = 0x4, scoped, tag = 'scoped memory for tpu_custom_call.1']
    #allocation6 [shape = 'u8[512]{0}', space=vmem, size = 0x400, scoped, tag = 'output window, operand 0, single buffered']
    %8 = vsyncpa [#allocation4], 0
    %9 = vsyncpa [#allocation5], 0
    // Predicated region
    $region2: #{tpu_custom_call.1} parent=1 // pred_check
      _
    $region3: #{tpu_custom_call.1} parent=1 // pred_check_branch
      %11 = sbr.rel (0) target = $region5
    $region4: #{tpu_custom_call.1} parent=1 // pred_region
      %13 = vsyncadd [#allocation4], 0
      %s14 = sshll.u32 %s0, 4
      %s15 = int_to_ptr.hbm [resolvable:$true] %s14
      %s16 = sshll.u32 [#allocation3], 4
      %s17 = int_to_ptr.vmem [resolvable:$true] %s16
      %22 = dma.hbm_to_vmem [thread:$0]  %s15, 2048, %s17, [#allocation4], 128, 128, 8
    $region5: #{tpu_custom_call.1} parent=1 // pred_fallthru
      _
    // Predicated region
    $region6: #{tpu_custom_call.1} parent=1 // pred_check
      _
    $region7: #{tpu_custom_call.1} parent=1 // pred_check_branch
      %24 = sbr.rel (0) target = $region9
    $region8: #{tpu_custom_call.1} parent=1 // pred_region
      _
    $region9: #{tpu_custom_call.1} parent=1 // pred_fallthru
      _
    // Predicated region
    $region10: #{tpu_custom_call.1} parent=1 // pred_check
      _
    $region11: #{tpu_custom_call.1} parent=1 // pred_check_branch
      %26 = sbr.rel (0) target = $region13
    $region12: #{tpu_custom_call.1} parent=1 // pred_region
      _
    $region13: #{tpu_custom_call.1} parent=1 // pred_fallthru
      _
    // Predicated region
    $region14: #{tpu_custom_call.1} parent=1 // pred_check
      _
    $region15: #{tpu_custom_call.1} parent=1 // pred_check_branch
      %28 = sbr.rel (0) target = $region17
    $region16: #{tpu_custom_call.1} parent=1 // pred_region
      %30 = dma.done [#allocation4], 2048
    $region17: #{tpu_custom_call.1} parent=1 // pred_fallthru
      _
    %p31 = scmp.eq.s32.totalorder 0, 0
    // Predicated region
    $region18: #{tpu_custom_call.1} parent=1 // pred_check
      %p32 = pneg %p31
    $region19: #{tpu_custom_call.1} parent=1 // pred_check_branch
      %34 = sbr.rel (%p32) target = $region21
    $region20: #{tpu_custom_call.1} parent=1 // pred_region
      %35 = vst [vmem:[#allocation2] sm:$0xff] 0.0
      %36 = vst [vmem:[#allocation2 + $0x8] sm:$0xff] 0.0
      %37 = vst [vmem:[#allocation2 + $0x10] sm:$0xff] 0.0
      %38 = vst [vmem:[#allocation2 + $0x18] sm:$0xff] 0.0
    $region21: #{tpu_custom_call.1} parent=1 // pred_fallthru
      _
    %v39 = vld [vmem:[#allocation3] sm:$0xff]
    %v40 = vld [vmem:[#allocation3 + $0x8] sm:$0xff]
    %v41 = vld [vmem:[#allocation3 + $0x10] sm:$0xff]
    %v42 = vld [vmem:[#allocation3 + $0x18] sm:$0xff]
    %v43 = vld [vmem:[#allocation3 + $0x20] sm:$0xff]
    %v44 = vld [vmem:[#allocation3 + $0x28] sm:$0xff]
    %v45 = vld [vmem:[#allocation3 + $0x30] sm:$0xff]
    %v46 = vld [vmem:[#allocation3 + $0x38] sm:$0xff]
    %v47 = vld [vmem:[#allocation3 + $0x40] sm:$0xff]
    %v48 = vld [vmem:[#allocation3 + $0x48] sm:$0xff]
    %v49 = vld [vmem:[#allocation3 + $0x50] sm:$0xff]
    %v50 = vld [vmem:[#allocation3 + $0x58] sm:$0xff]
    %v51 = vld [vmem:[#allocation3 + $0x60] sm:$0xff]
    %v52 = vld [vmem:[#allocation3 + $0x68] sm:$0xff]
    %v53 = vld [vmem:[#allocation3 + $0x70] sm:$0xff]
    %v54 = vld [vmem:[#allocation3 + $0x78] sm:$0xff]
    %v55 = vld [vmem:[%s1] sm:$0xf]
    %v56 = vld [vmem:[%s1 + $0x4] sm:$0xf]
    %v57 = vld [vmem:[%s1 + $0x8] sm:$0xf]
    %v58 = vld [vmem:[%s1 + $0xc] sm:$0xf]
    %v59 = vld [vmem:[%s1 + $0x10] sm:$0xf]
    %v60 = vld [vmem:[%s1 + $0x14] sm:$0xf]
    %v61 = vld [vmem:[%s1 + $0x18] sm:$0xf]
    %v62 = vld [vmem:[%s1 + $0x1c] sm:$0xf]
    %v63 = vld [vmem:[%s1 + $0x20] sm:$0xf]
    %v64 = vld [vmem:[%s1 + $0x24] sm:$0xf]
    %v65 = vld [vmem:[%s1 + $0x28] sm:$0xf]
    %v66 = vld [vmem:[%s1 + $0x2c] sm:$0xf]
    %v67 = vld [vmem:[%s1 + $0x30] sm:$0xf]
    %v68 = vld [vmem:[%s1 + $0x34] sm:$0xf]
    %v69 = vld [vmem:[%s1 + $0x38] sm:$0xf]
    %v70 = vld [vmem:[%s1 + $0x3c] sm:$0xf]
    %72 = vset.pattern.permute.xlu0 0
    %73 = vperm.xlu0 %72, %v55
    %v74 = vpop.permute.xlu0 %73
    %76 = vset.pattern.permute.xlu0 0
    %77 = vperm.xlu0 %76, %v56
    %v78 = vpop.permute.xlu0 %77
    %80 = vset.pattern.permute.xlu0 0
    %81 = vperm.xlu0 %80, %v57
    %v82 = vpop.permute.xlu0 %81
    %84 = vset.pattern.permute.xlu0 0
    %85 = vperm.xlu0 %84, %v58
    %v86 = vpop.permute.xlu0 %85
    %88 = vset.pattern.permute.xlu0 0
    %89 = vperm.xlu0 %88, %v59
    %v90 = vpop.permute.xlu0 %89
    %92 = vset.pattern.permute.xlu0 0
    %93 = vperm.xlu0 %92, %v60
    %v94 = vpop.permute.xlu0 %93
    %96 = vset.pattern.permute.xlu0 0
    %97 = vperm.xlu0 %96, %v61
    %v98 = vpop.permute.xlu0 %97
    %100 = vset.pattern.permute.xlu0 0
    %101 = vperm.xlu0 %100, %v62
    %v102 = vpop.permute.xlu0 %101
    %104 = vset.pattern.permute.xlu0 0
    %105 = vperm.xlu0 %104, %v63
    %v106 = vpop.permute.xlu0 %105
    %108 = vset.pattern.permute.xlu0 0
    %109 = vperm.xlu0 %108, %v64
    %v110 = vpop.permute.xlu0 %109
    %112 = vset.pattern.permute.xlu0 0
    %113 = vperm.xlu0 %112, %v65
    %v114 = vpop.permute.xlu0 %113
    %116 = vset.pattern.permute.xlu0 0
    %117 = vperm.xlu0 %116, %v66
    %v118 = vpop.permute.xlu0 %117
    %120 = vset.pattern.permute.xlu0 0
    %121 = vperm.xlu0 %120, %v67
    %v122 = vpop.permute.xlu0 %121
    %124 = vset.pattern.permute.xlu0 0
    %125 = vperm.xlu0 %124, %v68
    %v126 = vpop.permute.xlu0 %125
    %128 = vset.pattern.permute.xlu0 0
    %129 = vperm.xlu0 %128, %v69
    %v130 = vpop.permute.xlu0 %129
    %132 = vset.pattern.permute.xlu0 0
    %133 = vperm.xlu0 %132, %v70
    %v134 = vpop.permute.xlu0 %133
    %v136 = vunpack.c.l.s4 839922192
    %v137 = vunpack.c.0.s8 %v136
    %v138 = vperm.slane %v74, %v137
    %v140 = vunpack.c.l.s4 839922192
    %v141 = vunpack.c.0.s8 %v140
    %v142 = vperm.slane %v78, %v141
    %v144 = vunpack.c.l.s4 839922192
    %v145 = vunpack.c.0.s8 %v144
    %v146 = vperm.slane %v82, %v145
    %v148 = vunpack.c.l.s4 839922192
    %v149 = vunpack.c.0.s8 %v148
    %v150 = vperm.slane %v86, %v149
    %v152 = vunpack.c.l.s4 839922192
    %v153 = vunpack.c.0.s8 %v152
    %v154 = vperm.slane %v90, %v153
    %v156 = vunpack.c.l.s4 839922192
    %v157 = vunpack.c.0.s8 %v156
    %v158 = vperm.slane %v94, %v157
    %v160 = vunpack.c.l.s4 839922192
    %v161 = vunpack.c.0.s8 %v160
    %v162 = vperm.slane %v98, %v161
    %v164 = vunpack.c.l.s4 839922192
    %v165 = vunpack.c.0.s8 %v164
    %v166 = vperm.slane %v102, %v165
    %v168 = vunpack.c.l.s4 839922192
    %v169 = vunpack.c.0.s8 %v168
    %v170 = vperm.slane %v106, %v169
    %v172 = vunpack.c.l.s4 839922192
    %v173 = vunpack.c.0.s8 %v172
    %v174 = vperm.slane %v110, %v173
    %v176 = vunpack.c.l.s4 839922192
    %v177 = vunpack.c.0.s8 %v176
    %v178 = vperm.slane %v114, %v177
    %v180 = vunpack.c.l.s4 839922192
    %v181 = vunpack.c.0.s8 %v180
    %v182 = vperm.slane %v118, %v181
    %v184 = vunpack.c.l.s4 839922192
    %v185 = vunpack.c.0.s8 %v184
    %v186 = vperm.slane %v122, %v185
    %v188 = vunpack.c.l.s4 839922192
    %v189 = vunpack.c.0.s8 %v188
    %v190 = vperm.slane %v126, %v189
    %v192 = vunpack.c.l.s4 839922192
    %v193 = vunpack.c.0.s8 %v192
    %v194 = vperm.slane %v130, %v193
    %v196 = vunpack.c.l.s4 839922192
    %v197 = vunpack.c.0.s8 %v196
    %v198 = vperm.slane %v134, %v197
    %v215 = vmul.f32 %v39, %v138
    %v216 = vmul.f32 %v40, %v142
    %v217 = vmul.f32 %v41, %v146
    %v218 = vmul.f32 %v42, %v150
    %v219 = vmul.f32 %v43, %v154
    %v220 = vmul.f32 %v44, %v158
    %v221 = vmul.f32 %v45, %v162
    %v222 = vmul.f32 %v46, %v166
    %v223 = vmul.f32 %v47, %v170
    %v224 = vmul.f32 %v48, %v174
    %v225 = vmul.f32 %v49, %v178
    %v226 = vmul.f32 %v50, %v182
    %v227 = vmul.f32 %v51, %v186
    %v228 = vmul.f32 %v52, %v190
    %v229 = vmul.f32 %v53, %v194
    %v230 = vmul.f32 %v54, %v198
    %247 = vst [vmem:[#allocation1] ss:$2 sm:$0xff] %v215
    %v248 = vld.sshfl [vmem:[#allocation1] sm:$0xff pattern:$0x75316420]
    %v249 = vld.sshfl [vmem:[#allocation1 + $0x8] sm:$0xff pattern:$0x75316420]
    %s250 = scalar_lea.vmem [#allocation1], 16
    %251 = vst [vmem:[%s250] ss:$2 sm:$0xff] %v216
    %v252 = vld.sshfl [vmem:[#allocation1 + $0x10] sm:$0xff pattern:$0x75316420]
    %v253 = vld.sshfl [vmem:[#allocation1 + $0x18] sm:$0xff pattern:$0x75316420]
    %s254 = scalar_lea.vmem [#allocation1], 32
    %255 = vst [vmem:[%s254] ss:$2 sm:$0xff] %v217
    %v256 = vld.sshfl [vmem:[#allocation1 + $0x20] sm:$0xff pattern:$0x75316420]
    %v257 = vld.sshfl [vmem:[#allocation1 + $0x28] sm:$0xff pattern:$0x75316420]
    %s258 = scalar_lea.vmem [#allocation1], 48
    %259 = vst [vmem:[%s258] ss:$2 sm:$0xff] %v218
    %v260 = vld.sshfl [vmem:[#allocation1 + $0x30] sm:$0xff pattern:$0x75316420]
    %v261 = vld.sshfl [vmem:[#allocation1 + $0x38] sm:$0xff pattern:$0x75316420]
    %262 = vst [vmem:[#allocation1] ss:$2 sm:$0xff] %v219
    %v263 = vld.sshfl [vmem:[#allocation1] sm:$0xff pattern:$0x75316420]
    %v264 = vld.sshfl [vmem:[#allocation1 + $0x8] sm:$0xff pattern:$0x75316420]
    %265 = vst [vmem:[%s250] ss:$2 sm:$0xff] %v220
    %v266 = vld.sshfl [vmem:[#allocation1 + $0x10] sm:$0xff pattern:$0x75316420]
    %v267 = vld.sshfl [vmem:[#allocation1 + $0x18] sm:$0xff pattern:$0x75316420]
    %268 = vst [vmem:[%s254] ss:$2 sm:$0xff] %v221
    %v269 = vld.sshfl [vmem:[#allocation1 + $0x20] sm:$0xff pattern:$0x75316420]
    %v270 = vld.sshfl [vmem:[#allocation1 + $0x28] sm:$0xff pattern:$0x75316420]
    %271 = vst [vmem:[%s258] ss:$2 sm:$0xff] %v222
    %v272 = vld.sshfl [vmem:[#allocation1 + $0x30] sm:$0xff pattern:$0x75316420]
    %v273 = vld.sshfl [vmem:[#allocation1 + $0x38] sm:$0xff pattern:$0x75316420]
    %274 = vst [vmem:[#allocation1] ss:$2 sm:$0xff] %v223
    %v275 = vld.sshfl [vmem:[#allocation1] sm:$0xff pattern:$0x75316420]
    %v276 = vld.sshfl [vmem:[#allocation1 + $0x8] sm:$0xff pattern:$0x75316420]
    %277 = vst [vmem:[%s250] ss:$2 sm:$0xff] %v224
    %v278 = vld.sshfl [vmem:[#allocation1 + $0x10] sm:$0xff pattern:$0x75316420]
    %v279 = vld.sshfl [vmem:[#allocation1 + $0x18] sm:$0xff pattern:$0x75316420]
    %280 = vst [vmem:[%s254] ss:$2 sm:$0xff] %v225
    %v281 = vld.sshfl [vmem:[#allocation1 + $0x20] sm:$0xff pattern:$0x75316420]
    %v282 = vld.sshfl [vmem:[#allocation1 + $0x28] sm:$0xff pattern:$0x75316420]
    %283 = vst [vmem:[%s258] ss:$2 sm:$0xff] %v226
    %v284 = vld.sshfl [vmem:[#allocation1 + $0x30] sm:$0xff pattern:$0x75316420]
    %v285 = vld.sshfl [vmem:[#allocation1 + $0x38] sm:$0xff pattern:$0x75316420]
    %286 = vst [vmem:[#allocation1] ss:$2 sm:$0xff] %v227
    %v287 = vld.sshfl [vmem:[#allocation1] sm:$0xff pattern:$0x75316420]
    %v288 = vld.sshfl [vmem:[#allocation1 + $0x8] sm:$0xff pattern:$0x75316420]
    %289 = vst [vmem:[%s250] ss:$2 sm:$0xff] %v228
    %v290 = vld.sshfl [vmem:[#allocation1 + $0x10] sm:$0xff pattern:$0x75316420]
    %v291 = vld.sshfl [vmem:[#allocation1 + $0x18] sm:$0xff pattern:$0x75316420]
    %292 = vst [vmem:[%s254] ss:$2 sm:$0xff] %v229
    %v293 = vld.sshfl [vmem:[#allocation1 + $0x20] sm:$0xff pattern:$0x75316420]
    %v294 = vld.sshfl [vmem:[#allocation1 + $0x28] sm:$0xff pattern:$0x75316420]
    %295 = vst [vmem:[%s258] ss:$2 sm:$0xff] %v230
    %v296 = vld.sshfl [vmem:[#allocation1 + $0x30] sm:$0xff pattern:$0x75316420]
    %v297 = vld.sshfl [vmem:[#allocation1 + $0x38] sm:$0xff pattern:$0x75316420]
    %vm330 = vcmask 1043456
    %v331 = vsel %vm330, %v248, 0.0
    %v332 = vrot.slane %v331, 4
    %v333 = vadd.f32 %v331, %v332
    %v334 = vrot.slane %v333, 2
    %v335 = vadd.f32 %v333, %v334
    %v336 = vrot.slane %v335, 1
    %v337 = vadd.f32 %v335, %v336
    %v338 = vsel %vm330, %v249, 0.0
    %v339 = vrot.slane %v338, 4
    %v340 = vadd.f32 %v338, %v339
    %v341 = vrot.slane %v340, 2
    %v342 = vadd.f32 %v340, %v341
    %v343 = vrot.slane %v342, 1
    %v344 = vadd.f32 %v342, %v343
    %v345 = vsel %vm330, %v252, 0.0
    %v346 = vrot.slane %v345, 4
    %v347 = vadd.f32 %v345, %v346
    %v348 = vrot.slane %v347, 2
    %v349 = vadd.f32 %v347, %v348
    %v350 = vrot.slane %v349, 1
    %v351 = vadd.f32 %v349, %v350
    %v352 = vsel %vm330, %v253, 0.0
    %v353 = vrot.slane %v352, 4
    %v354 = vadd.f32 %v352, %v353
    %v355 = vrot.slane %v354, 2
    %v356 = vadd.f32 %v354, %v355
    %v357 = vrot.slane %v356, 1
    %v358 = vadd.f32 %v356, %v357
    %v359 = vsel %vm330, %v256, 0.0
    %v360 = vrot.slane %v359, 4
    %v361 = vadd.f32 %v359, %v360
    %v362 = vrot.slane %v361, 2
    %v363 = vadd.f32 %v361, %v362
    %v364 = vrot.slane %v363, 1
    %v365 = vadd.f32 %v363, %v364
    %v366 = vsel %vm330, %v257, 0.0
    %v367 = vrot.slane %v366, 4
    %v368 = vadd.f32 %v366, %v367
    %v369 = vrot.slane %v368, 2
    %v370 = vadd.f32 %v368, %v369
    %v371 = vrot.slane %v370, 1
    %v372 = vadd.f32 %v370, %v371
    %v373 = vsel %vm330, %v260, 0.0
    %v374 = vrot.slane %v373, 4
    %v375 = vadd.f32 %v373, %v374
    %v376 = vrot.slane %v375, 2
    %v377 = vadd.f32 %v375, %v376
    %v378 = vrot.slane %v377, 1
    %v379 = vadd.f32 %v377, %v378
    %v380 = vsel %vm330, %v261, 0.0
    %v381 = vrot.slane %v380, 4
    %v382 = vadd.f32 %v380, %v381
    %v383 = vrot.slane %v382, 2
    %v384 = vadd.f32 %v382, %v383
    %v385 = vrot.slane %v384, 1
    %v386 = vadd.f32 %v384, %v385
    %v387 = vsel %vm330, %v263, 0.0
    %v388 = vrot.slane %v387, 4
    %v389 = vadd.f32 %v387, %v388
    %v390 = vrot.slane %v389, 2
    %v391 = vadd.f32 %v389, %v390
    %v392 = vrot.slane %v391, 1
    %v393 = vadd.f32 %v391, %v392
    %v394 = vsel %vm330, %v264, 0.0
    %v395 = vrot.slane %v394, 4
    %v396 = vadd.f32 %v394, %v395
    %v397 = vrot.slane %v396, 2
    %v398 = vadd.f32 %v396, %v397
    %v399 = vrot.slane %v398, 1
    %v400 = vadd.f32 %v398, %v399
    %v401 = vsel %vm330, %v266, 0.0
    %v402 = vrot.slane %v401, 4
    %v403 = vadd.f32 %v401, %v402
    %v404 = vrot.slane %v403, 2
    %v405 = vadd.f32 %v403, %v404
    %v406 = vrot.slane %v405, 1
    %v407 = vadd.f32 %v405, %v406
    %v408 = vsel %vm330, %v267, 0.0
    %v409 = vrot.slane %v408, 4
    %v410 = vadd.f32 %v408, %v409
    %v411 = vrot.slane %v410, 2
    %v412 = vadd.f32 %v410, %v411
    %v413 = vrot.slane %v412, 1
    %v414 = vadd.f32 %v412, %v413
    %v415 = vsel %vm330, %v269, 0.0
    %v416 = vrot.slane %v415, 4
    %v417 = vadd.f32 %v415, %v416
    %v418 = vrot.slane %v417, 2
    %v419 = vadd.f32 %v417, %v418
    %v420 = vrot.slane %v419, 1
    %v421 = vadd.f32 %v419, %v420
    %v422 = vsel %vm330, %v270, 0.0
    %v423 = vrot.slane %v422, 4
    %v424 = vadd.f32 %v422, %v423
    %v425 = vrot.slane %v424, 2
    %v426 = vadd.f32 %v424, %v425
    %v427 = vrot.slane %v426, 1
    %v428 = vadd.f32 %v426, %v427
    %v429 = vsel %vm330, %v272, 0.0
    %v430 = vrot.slane %v429, 4
    %v431 = vadd.f32 %v429, %v430
    %v432 = vrot.slane %v431, 2
    %v433 = vadd.f32 %v431, %v432
    %v434 = vrot.slane %v433, 1
    %v435 = vadd.f32 %v433, %v434
    %v436 = vsel %vm330, %v273, 0.0
    %v437 = vrot.slane %v436, 4
    %v438 = vadd.f32 %v436, %v437
    %v439 = vrot.slane %v438, 2
    %v440 = vadd.f32 %v438, %v439
    %v441 = vrot.slane %v440, 1
    %v442 = vadd.f32 %v440, %v441
    %v443 = vsel %vm330, %v275, 0.0
    %v444 = vrot.slane %v443, 4
    %v445 = vadd.f32 %v443, %v444
    %v446 = vrot.slane %v445, 2
    %v447 = vadd.f32 %v445, %v446
    %v448 = vrot.slane %v447, 1
    %v449 = vadd.f32 %v447, %v448
    %v450 = vsel %vm330, %v276, 0.0
    %v451 = vrot.slane %v450, 4
    %v452 = vadd.f32 %v450, %v451
    %v453 = vrot.slane %v452, 2
    %v454 = vadd.f32 %v452, %v453
    %v455 = vrot.slane %v454, 1
    %v456 = vadd.f32 %v454, %v455
    %v457 = vsel %vm330, %v278, 0.0
    %v458 = vrot.slane %v457, 4
    %v459 = vadd.f32 %v457, %v458
    %v460 = vrot.slane %v459, 2
    %v461 = vadd.f32 %v459, %v460
    %v462 = vrot.slane %v461, 1
    %v463 = vadd.f32 %v461, %v462
    %v464 = vsel %vm330, %v279, 0.0
    %v465 = vrot.slane %v464, 4
    %v466 = vadd.f32 %v464, %v465
    %v467 = vrot.slane %v466, 2
    %v468 = vadd.f32 %v466, %v467
    %v469 = vrot.slane %v468, 1
    %v470 = vadd.f32 %v468, %v469
    %v471 = vsel %vm330, %v281, 0.0
    %v472 = vrot.slane %v471, 4
    %v473 = vadd.f32 %v471, %v472
    %v474 = vrot.slane %v473, 2
    %v475 = vadd.f32 %v473, %v474
    %v476 = vrot.slane %v475, 1
    %v477 = vadd.f32 %v475, %v476
    %v478 = vsel %vm330, %v282, 0.0
    %v479 = vrot.slane %v478, 4
    %v480 = vadd.f32 %v478, %v479
    %v481 = vrot.slane %v480, 2
    %v482 = vadd.f32 %v480, %v481
    %v483 = vrot.slane %v482, 1
    %v484 = vadd.f32 %v482, %v483
    %v485 = vsel %vm330, %v284, 0.0
    %v486 = vrot.slane %v485, 4
    %v487 = vadd.f32 %v485, %v486
    %v488 = vrot.slane %v487, 2
    %v489 = vadd.f32 %v487, %v488
    %v490 = vrot.slane %v489, 1
    %v491 = vadd.f32 %v489, %v490
    %v492 = vsel %vm330, %v285, 0.0
    %v493 = vrot.slane %v492, 4
    %v494 = vadd.f32 %v492, %v493
    %v495 = vrot.slane %v494, 2
    %v496 = vadd.f32 %v494, %v495
    %v497 = vrot.slane %v496, 1
    %v498 = vadd.f32 %v496, %v497
    %v499 = vsel %vm330, %v287, 0.0
    %v500 = vrot.slane %v499, 4
    %v501 = vadd.f32 %v499, %v500
    %v502 = vrot.slane %v501, 2
    %v503 = vadd.f32 %v501, %v502
    %v504 = vrot.slane %v503, 1
    %v505 = vadd.f32 %v503, %v504
    %v506 = vsel %vm330, %v288, 0.0
    %v507 = vrot.slane %v506, 4
    %v508 = vadd.f32 %v506, %v507
    %v509 = vrot.slane %v508, 2
    %v510 = vadd.f32 %v508, %v509
    %v511 = vrot.slane %v510, 1
    %v512 = vadd.f32 %v510, %v511
    %v513 = vsel %vm330, %v290, 0.0
    %v514 = vrot.slane %v513, 4
    %v515 = vadd.f32 %v513, %v514
    %v516 = vrot.slane %v515, 2
    %v517 = vadd.f32 %v515, %v516
    %v518 = vrot.slane %v517, 1
    %v519 = vadd.f32 %v517, %v518
    %v520 = vsel %vm330, %v291, 0.0
    %v521 = vrot.slane %v520, 4
    %v522 = vadd.f32 %v520, %v521
    %v523 = vrot.slane %v522, 2
    %v524 = vadd.f32 %v522, %v523
    %v525 = vrot.slane %v524, 1
    %v526 = vadd.f32 %v524, %v525
    %v527 = vsel %vm330, %v293, 0.0
    %v528 = vrot.slane %v527, 4
    %v529 = vadd.f32 %v527, %v528
    %v530 = vrot.slane %v529, 2
    %v531 = vadd.f32 %v529, %v530
    %v532 = vrot.slane %v531, 1
    %v533 = vadd.f32 %v531, %v532
    %v534 = vsel %vm330, %v294, 0.0
    %v535 = vrot.slane %v534, 4
    %v536 = vadd.f32 %v534, %v535
    %v537 = vrot.slane %v536, 2
    %v538 = vadd.f32 %v536, %v537
    %v539 = vrot.slane %v538, 1
    %v540 = vadd.f32 %v538, %v539
    %v541 = vsel %vm330, %v296, 0.0
    %v542 = vrot.slane %v541, 4
    %v543 = vadd.f32 %v541, %v542
    %v544 = vrot.slane %v543, 2
    %v545 = vadd.f32 %v543, %v544
    %v546 = vrot.slane %v545, 1
    %v547 = vadd.f32 %v545, %v546
    %v548 = vsel %vm330, %v297, 0.0
    %v549 = vrot.slane %v548, 4
    %v550 = vadd.f32 %v548, %v549
    %v551 = vrot.slane %v550, 2
    %v552 = vadd.f32 %v550, %v551
    %v553 = vrot.slane %v552, 1
    %v554 = vadd.f32 %v552, %v553
    %v555 = vld [vmem:[%s2] sm:$0xff]
    %v556 = vld [vmem:[%s2 + $0x8] sm:$0xff]
    %v557 = vld [vmem:[%s2 + $0x10] sm:$0xff]
    %v558 = vld [vmem:[%s2 + $0x18] sm:$0xff]
    %v559 = vmax.f32 %v337, 0.0
    %v560 = vmax.f32 %v344, 0.0
    %v561 = vmax.f32 %v351, 0.0
    %v562 = vmax.f32 %v358, 0.0
    %v563 = vmax.f32 %v365, 0.0
    %v564 = vmax.f32 %v372, 0.0
    %v565 = vmax.f32 %v379, 0.0
    %v566 = vmax.f32 %v386, 0.0
    %v567 = vmax.f32 %v393, 0.0
    %v568 = vmax.f32 %v400, 0.0
    %v569 = vmax.f32 %v407, 0.0
    %v570 = vmax.f32 %v414, 0.0
    %v571 = vmax.f32 %v421, 0.0
    %v572 = vmax.f32 %v428, 0.0
    %v573 = vmax.f32 %v435, 0.0
    %v574 = vmax.f32 %v442, 0.0
    %v575 = vmax.f32 %v449, 0.0
    %v576 = vmax.f32 %v456, 0.0
    %v577 = vmax.f32 %v463, 0.0
    %v578 = vmax.f32 %v470, 0.0
    %v579 = vmax.f32 %v477, 0.0
    %v580 = vmax.f32 %v484, 0.0
    %v581 = vmax.f32 %v491, 0.0
    %v582 = vmax.f32 %v498, 0.0
    %v583 = vmax.f32 %v505, 0.0
    %v584 = vmax.f32 %v512, 0.0
    %v585 = vmax.f32 %v519, 0.0
    %v586 = vmax.f32 %v526, 0.0
    %v587 = vmax.f32 %v533, 0.0
    %v588 = vmax.f32 %v540, 0.0
    %v589 = vmax.f32 %v547, 0.0
    %v590 = vmax.f32 %v554, 0.0
    %v595 = vrot.slane %v555, 1
    %v596 = vrot.slane %v556, 1
    %v597 = vrot.slane %v555, 2
    %v598 = vrot.slane %v556, 2
    %v599 = vrot.slane %v555, 3
    %v600 = vrot.slane %v556, 3
    %v601 = vrot.slane %v555, 4
    %v602 = vrot.slane %v556, 4
    %v603 = vrot.slane %v555, 5
    %v604 = vrot.slane %v556, 5
    %v605 = vrot.slane %v555, 6
    %v606 = vrot.slane %v556, 6
    %v607 = vrot.slane %v555, 7
    %v608 = vrot.slane %v556, 7
    %v609 = vrot.slane %v557, 1
    %v610 = vrot.slane %v558, 1
    %v611 = vrot.slane %v557, 2
    %v612 = vrot.slane %v558, 2
    %v613 = vrot.slane %v557, 3
    %v614 = vrot.slane %v558, 3
    %v615 = vrot.slane %v557, 4
    %v616 = vrot.slane %v558, 4
    %v617 = vrot.slane %v557, 5
    %v618 = vrot.slane %v558, 5
    %v619 = vrot.slane %v557, 6
    %v620 = vrot.slane %v558, 6
    %v621 = vrot.slane %v557, 7
    %v622 = vrot.slane %v558, 7
    %v655 = vmul.f32 %v337, %v555
    %v656 = vmul.f32 %v344, %v556
    %v657 = vmul.f32 %v351, %v595
    %v658 = vmul.f32 %v358, %v596
    %v659 = vmul.f32 %v365, %v597
    %v660 = vmul.f32 %v372, %v598
    %v661 = vmul.f32 %v379, %v599
    %v662 = vmul.f32 %v386, %v600
    %v663 = vmul.f32 %v393, %v601
    %v664 = vmul.f32 %v400, %v602
    %v665 = vmul.f32 %v407, %v603
    %v666 = vmul.f32 %v414, %v604
    %v667 = vmul.f32 %v421, %v605
    %v668 = vmul.f32 %v428, %v606
    %v669 = vmul.f32 %v435, %v607
    %v670 = vmul.f32 %v442, %v608
    %v671 = vmul.f32 %v449, %v557
    %v672 = vmul.f32 %v456, %v558
    %v673 = vmul.f32 %v463, %v609
    %v674 = vmul.f32 %v470, %v610
    %v675 = vmul.f32 %v477, %v611
    %v676 = vmul.f32 %v484, %v612
    %v677 = vmul.f32 %v491, %v613
    %v678 = vmul.f32 %v498, %v614
    %v679 = vmul.f32 %v505, %v615
    %v680 = vmul.f32 %v512, %v616
    %v681 = vmul.f32 %v519, %v617
    %v682 = vmul.f32 %v526, %v618
    %v683 = vmul.f32 %v533, %v619
    %v684 = vmul.f32 %v540, %v620
    %v685 = vmul.f32 %v547, %v621
    %v686 = vmul.f32 %v554, %v622
    %v687 = vsub.f32 %v559, %v655
    %v688 = vsub.f32 %v560, %v656
    %v689 = vsub.f32 %v561, %v657
    %v690 = vsub.f32 %v562, %v658
    %v691 = vsub.f32 %v563, %v659
    %v692 = vsub.f32 %v564, %v660
    %v693 = vsub.f32 %v565, %v661
    %v694 = vsub.f32 %v566, %v662
    %v695 = vsub.f32 %v567, %v663
    %v696 = vsub.f32 %v568, %v664
    %v697 = vsub.f32 %v569, %v665
    %v698 = vsub.f32 %v570, %v666
    %v699 = vsub.f32 %v571, %v667
    %v700 = vsub.f32 %v572, %v668
    %v701 = vsub.f32 %v573, %v669
    %v702 = vsub.f32 %v574, %v670
    %v703 = vsub.f32 %v575, %v671
    %v704 = vsub.f32 %v576, %v672
    %v705 = vsub.f32 %v577, %v673
    %v706 = vsub.f32 %v578, %v674
    %v707 = vsub.f32 %v579, %v675
    %v708 = vsub.f32 %v580, %v676
    %v709 = vsub.f32 %v581, %v677
    %v710 = vsub.f32 %v582, %v678
    %v711 = vsub.f32 %v583, %v679
    %v712 = vsub.f32 %v584, %v680
    %v713 = vsub.f32 %v585, %v681
    %v714 = vsub.f32 %v586, %v682
    %v715 = vsub.f32 %v587, %v683
    %v716 = vsub.f32 %v588, %v684
    %v717 = vsub.f32 %v589, %v685
    %v718 = vsub.f32 %v590, %v686
    %v719 = vand.u32 2147483647, %v337
    %v720 = vand.u32 2147483647, %v344
    %v721 = vand.u32 2147483647, %v351
    %v722 = vand.u32 2147483647, %v358
    %v723 = vand.u32 2147483647, %v365
    %v724 = vand.u32 2147483647, %v372
    %v725 = vand.u32 2147483647, %v379
    %v726 = vand.u32 2147483647, %v386
    %v727 = vand.u32 2147483647, %v393
    %v728 = vand.u32 2147483647, %v400
    %v729 = vand.u32 2147483647, %v407
    %v730 = vand.u32 2147483647, %v414
    %v731 = vand.u32 2147483647, %v421
    %v732 = vand.u32 2147483647, %v428
    %v733 = vand.u32 2147483647, %v435
    %v734 = vand.u32 2147483647, %v442
    %v735 = vand.u32 2147483647, %v449
    %v736 = vand.u32 2147483647, %v456
    %v737 = vand.u32 2147483647, %v463
    %v738 = vand.u32 2147483647, %v470
    %v739 = vand.u32 2147483647, %v477
    %v740 = vand.u32 2147483647, %v484
    %v741 = vand.u32 2147483647, %v491
    %v742 = vand.u32 2147483647, %v498
    %v743 = vand.u32 2147483647, %v505
    %v744 = vand.u32 2147483647, %v512
    %v745 = vand.u32 2147483647, %v519
    %v746 = vand.u32 2147483647, %v526
    %v747 = vand.u32 2147483647, %v533
    %v748 = vand.u32 2147483647, %v540
    %v749 = vand.u32 2147483647, %v547
    %v750 = vand.u32 2147483647, %v554
    %v751 = vsub.f32 0.0, %v719
    %v752 = vsub.f32 0.0, %v720
    %v753 = vsub.f32 0.0, %v721
    %v754 = vsub.f32 0.0, %v722
    %v755 = vsub.f32 0.0, %v723
    %v756 = vsub.f32 0.0, %v724
    %v757 = vsub.f32 0.0, %v725
    %v758 = vsub.f32 0.0, %v726
    %v759 = vsub.f32 0.0, %v727
    %v760 = vsub.f32 0.0, %v728
    %v761 = vsub.f32 0.0, %v729
    %v762 = vsub.f32 0.0, %v730
    %v763 = vsub.f32 0.0, %v731
    %v764 = vsub.f32 0.0, %v732
    %v765 = vsub.f32 0.0, %v733
    %v766 = vsub.f32 0.0, %v734
    %v767 = vsub.f32 0.0, %v735
    %v768 = vsub.f32 0.0, %v736
    %v769 = vsub.f32 0.0, %v737
    %v770 = vsub.f32 0.0, %v738
    %v771 = vsub.f32 0.0, %v739
    %v772 = vsub.f32 0.0, %v740
    %v773 = vsub.f32 0.0, %v741
    %v774 = vsub.f32 0.0, %v742
    %v775 = vsub.f32 0.0, %v743
    %v776 = vsub.f32 0.0, %v744
    %v777 = vsub.f32 0.0, %v745
    %v778 = vsub.f32 0.0, %v746
    %v779 = vsub.f32 0.0, %v747
    %v780 = vsub.f32 0.0, %v748
    %v781 = vsub.f32 0.0, %v749
    %v782 = vsub.f32 0.0, %v750
    %v783 = vmul.f32 %v751, 1.442695
    %v784 = vpow.pop %v783
    %v785 = vmul.f32 %v752, 1.442695
    %v786 = vpow.pop %v785
    %v787 = vmul.f32 %v753, 1.442695
    %v788 = vpow.pop %v787
    %v789 = vmul.f32 %v754, 1.442695
    %v790 = vpow.pop %v789
    %v791 = vmul.f32 %v755, 1.442695
    %v792 = vpow.pop %v791
    %v793 = vmul.f32 %v756, 1.442695
    %v794 = vpow.pop %v793
    %v795 = vmul.f32 %v757, 1.442695
    %v796 = vpow.pop %v795
    %v797 = vmul.f32 %v758, 1.442695
    %v798 = vpow.pop %v797
    %v799 = vmul.f32 %v759, 1.442695
    %v800 = vpow.pop %v799
    %v801 = vmul.f32 %v760, 1.442695
    %v802 = vpow.pop %v801
    %v803 = vmul.f32 %v761, 1.442695
    %v804 = vpow.pop %v803
    %v805 = vmul.f32 %v762, 1.442695
    %v806 = vpow.pop %v805
    %v807 = vmul.f32 %v763, 1.442695
    %v808 = vpow.pop %v807
    %v809 = vmul.f32 %v764, 1.442695
    %v810 = vpow.pop %v809
    %v811 = vmul.f32 %v765, 1.442695
    %v812 = vpow.pop %v811
    %v813 = vmul.f32 %v766, 1.442695
    %v814 = vpow.pop %v813
    %v815 = vmul.f32 %v767, 1.442695
    %v816 = vpow.pop %v815
    %v817 = vmul.f32 %v768, 1.442695
    %v818 = vpow.pop %v817
    %v819 = vmul.f32 %v769, 1.442695
    %v820 = vpow.pop %v819
    %v821 = vmul.f32 %v770, 1.442695
    %v822 = vpow.pop %v821
    %v823 = vmul.f32 %v771, 1.442695
    %v824 = vpow.pop %v823
    %v825 = vmul.f32 %v772, 1.442695
    %v826 = vpow.pop %v825
    %v827 = vmul.f32 %v773, 1.442695
    %v828 = vpow.pop %v827
    %v829 = vmul.f32 %v774, 1.442695
    %v830 = vpow.pop %v829
    %v831 = vmul.f32 %v775, 1.442695
    %v832 = vpow.pop %v831
    %v833 = vmul.f32 %v776, 1.442695
    %v834 = vpow.pop %v833
    %v835 = vmul.f32 %v777, 1.442695
    %v836 = vpow.pop %v835
    %v837 = vmul.f32 %v778, 1.442695
    %v838 = vpow.pop %v837
    %v839 = vmul.f32 %v779, 1.442695
    %v840 = vpow.pop %v839
    %v841 = vmul.f32 %v780, 1.442695
    %v842 = vpow.pop %v841
    %v843 = vmul.f32 %v781, 1.442695
    %v844 = vpow.pop %v843
    %v845 = vmul.f32 %v782, 1.442695
    %v846 = vpow.pop %v845
    %v847 = vadd.f32 %v784, 1.0
    %v848 = vlog2.pop %v847
    %v849 = vmul.f32 %v848, 0.6931472
    %v850 = vmul.f32 -0.5, %v784
    %v851 = vadd.f32 %v850, 1.0
    %v852 = vmul.f32 %v851, %v784
    %v853 = vand.u32 2147483647, %v784
    %vm854 = vcmp.lt.f32.partialorder %v853, 0.0004427343
    %v855 = vsel %vm854, %v852, %v849
    %v856 = vadd.f32 %v786, 1.0
    %v857 = vlog2.pop %v856
    %v858 = vmul.f32 %v857, 0.6931472
    %v859 = vmul.f32 -0.5, %v786
    %v860 = vadd.f32 %v859, 1.0
    %v861 = vmul.f32 %v860, %v786
    %v862 = vand.u32 2147483647, %v786
    %vm863 = vcmp.lt.f32.partialorder %v862, 0.0004427343
    %v864 = vsel %vm863, %v861, %v858
    %v865 = vadd.f32 %v788, 1.0
    %v866 = vlog2.pop %v865
    %v867 = vmul.f32 %v866, 0.6931472
    %v868 = vmul.f32 -0.5, %v788
    %v869 = vadd.f32 %v868, 1.0
    %v870 = vmul.f32 %v869, %v788
    %v871 = vand.u32 2147483647, %v788
    %vm872 = vcmp.lt.f32.partialorder %v871, 0.0004427343
    %v873 = vsel %vm872, %v870, %v867
    %v874 = vadd.f32 %v790, 1.0
    %v875 = vlog2.pop %v874
    %v876 = vmul.f32 %v875, 0.6931472
    %v877 = vmul.f32 -0.5, %v790
    %v878 = vadd.f32 %v877, 1.0
    %v879 = vmul.f32 %v878, %v790
    %v880 = vand.u32 2147483647, %v790
    %vm881 = vcmp.lt.f32.partialorder %v880, 0.0004427343
    %v882 = vsel %vm881, %v879, %v876
    %v883 = vadd.f32 %v792, 1.0
    %v884 = vlog2.pop %v883
    %v885 = vmul.f32 %v884, 0.6931472
    %v886 = vmul.f32 -0.5, %v792
    %v887 = vadd.f32 %v886, 1.0
    %v888 = vmul.f32 %v887, %v792
    %v889 = vand.u32 2147483647, %v792
    %vm890 = vcmp.lt.f32.partialorder %v889, 0.0004427343
    %v891 = vsel %vm890, %v888, %v885
    %v892 = vadd.f32 %v794, 1.0
    %v893 = vlog2.pop %v892
    %v894 = vmul.f32 %v893, 0.6931472
    %v895 = vmul.f32 -0.5, %v794
    %v896 = vadd.f32 %v895, 1.0
    %v897 = vmul.f32 %v896, %v794
    %v898 = vand.u32 2147483647, %v794
    %vm899 = vcmp.lt.f32.partialorder %v898, 0.0004427343
    %v900 = vsel %vm899, %v897, %v894
    %v901 = vadd.f32 %v796, 1.0
    %v902 = vlog2.pop %v901
    %v903 = vmul.f32 %v902, 0.6931472
    %v904 = vmul.f32 -0.5, %v796
    %v905 = vadd.f32 %v904, 1.0
    %v906 = vmul.f32 %v905, %v796
    %v907 = vand.u32 2147483647, %v796
    %vm908 = vcmp.lt.f32.partialorder %v907, 0.0004427343
    %v909 = vsel %vm908, %v906, %v903
    %v910 = vadd.f32 %v798, 1.0
    %v911 = vlog2.pop %v910
    %v912 = vmul.f32 %v911, 0.6931472
    %v913 = vmul.f32 -0.5, %v798
    %v914 = vadd.f32 %v913, 1.0
    %v915 = vmul.f32 %v914, %v798
    %v916 = vand.u32 2147483647, %v798
    %vm917 = vcmp.lt.f32.partialorder %v916, 0.0004427343
    %v918 = vsel %vm917, %v915, %v912
    %v919 = vadd.f32 %v800, 1.0
    %v920 = vlog2.pop %v919
    %v921 = vmul.f32 %v920, 0.6931472
    %v922 = vmul.f32 -0.5, %v800
    %v923 = vadd.f32 %v922, 1.0
    %v924 = vmul.f32 %v923, %v800
    %v925 = vand.u32 2147483647, %v800
    %vm926 = vcmp.lt.f32.partialorder %v925, 0.0004427343
    %v927 = vsel %vm926, %v924, %v921
    %v928 = vadd.f32 %v802, 1.0
    %v929 = vlog2.pop %v928
    %v930 = vmul.f32 %v929, 0.6931472
    %v931 = vmul.f32 -0.5, %v802
    %v932 = vadd.f32 %v931, 1.0
    %v933 = vmul.f32 %v932, %v802
    %v934 = vand.u32 2147483647, %v802
    %vm935 = vcmp.lt.f32.partialorder %v934, 0.0004427343
    %v936 = vsel %vm935, %v933, %v930
    %v937 = vadd.f32 %v804, 1.0
    %v938 = vlog2.pop %v937
    %v939 = vmul.f32 %v938, 0.6931472
    %v940 = vmul.f32 -0.5, %v804
    %v941 = vadd.f32 %v940, 1.0
    %v942 = vmul.f32 %v941, %v804
    %v943 = vand.u32 2147483647, %v804
    %vm944 = vcmp.lt.f32.partialorder %v943, 0.0004427343
    %v945 = vsel %vm944, %v942, %v939
    %v946 = vadd.f32 %v806, 1.0
    %v947 = vlog2.pop %v946
    %v948 = vmul.f32 %v947, 0.6931472
    %v949 = vmul.f32 -0.5, %v806
    %v950 = vadd.f32 %v949, 1.0
    %v951 = vmul.f32 %v950, %v806
    %v952 = vand.u32 2147483647, %v806
    %vm953 = vcmp.lt.f32.partialorder %v952, 0.0004427343
    %v954 = vsel %vm953, %v951, %v948
    %v955 = vadd.f32 %v808, 1.0
    %v956 = vlog2.pop %v955
    %v957 = vmul.f32 %v956, 0.6931472
    %v958 = vmul.f32 -0.5, %v808
    %v959 = vadd.f32 %v958, 1.0
    %v960 = vmul.f32 %v959, %v808
    %v961 = vand.u32 2147483647, %v808
    %vm962 = vcmp.lt.f32.partialorder %v961, 0.0004427343
    %v963 = vsel %vm962, %v960, %v957
    %v964 = vadd.f32 %v810, 1.0
    %v965 = vlog2.pop %v964
    %v966 = vmul.f32 %v965, 0.6931472
    %v967 = vmul.f32 -0.5, %v810
    %v968 = vadd.f32 %v967, 1.0
    %v969 = vmul.f32 %v968, %v810
    %v970 = vand.u32 2147483647, %v810
    %vm971 = vcmp.lt.f32.partialorder %v970, 0.0004427343
    %v972 = vsel %vm971, %v969, %v966
    %v973 = vadd.f32 %v812, 1.0
    %v974 = vlog2.pop %v973
    %v975 = vmul.f32 %v974, 0.6931472
    %v976 = vmul.f32 -0.5, %v812
    %v977 = vadd.f32 %v976, 1.0
    %v978 = vmul.f32 %v977, %v812
    %v979 = vand.u32 2147483647, %v812
    %vm980 = vcmp.lt.f32.partialorder %v979, 0.0004427343
    %v981 = vsel %vm980, %v978, %v975
    %v982 = vadd.f32 %v814, 1.0
    %v983 = vlog2.pop %v982
    %v984 = vmul.f32 %v983, 0.6931472
    %v985 = vmul.f32 -0.5, %v814
    %v986 = vadd.f32 %v985, 1.0
    %v987 = vmul.f32 %v986, %v814
    %v988 = vand.u32 2147483647, %v814
    %vm989 = vcmp.lt.f32.partialorder %v988, 0.0004427343
    %v990 = vsel %vm989, %v987, %v984
    %v991 = vadd.f32 %v816, 1.0
    %v992 = vlog2.pop %v991
    %v993 = vmul.f32 %v992, 0.6931472
    %v994 = vmul.f32 -0.5, %v816
    %v995 = vadd.f32 %v994, 1.0
    %v996 = vmul.f32 %v995, %v816
    %v997 = vand.u32 2147483647, %v816
    %vm998 = vcmp.lt.f32.partialorder %v997, 0.0004427343
    %v999 = vsel %vm998, %v996, %v993
    %v1000 = vadd.f32 %v818, 1.0
    %v1001 = vlog2.pop %v1000
    %v1002 = vmul.f32 %v1001, 0.6931472
    %v1003 = vmul.f32 -0.5, %v818
    %v1004 = vadd.f32 %v1003, 1.0
    %v1005 = vmul.f32 %v1004, %v818
    %v1006 = vand.u32 2147483647, %v818
    %vm1007 = vcmp.lt.f32.partialorder %v1006, 0.0004427343
    %v1008 = vsel %vm1007, %v1005, %v1002
    %v1009 = vadd.f32 %v820, 1.0
    %v1010 = vlog2.pop %v1009
    %v1011 = vmul.f32 %v1010, 0.6931472
    %v1012 = vmul.f32 -0.5, %v820
    %v1013 = vadd.f32 %v1012, 1.0
    %v1014 = vmul.f32 %v1013, %v820
    %v1015 = vand.u32 2147483647, %v820
    %vm1016 = vcmp.lt.f32.partialorder %v1015, 0.0004427343
    %v1017 = vsel %vm1016, %v1014, %v1011
    %v1018 = vadd.f32 %v822, 1.0
    %v1019 = vlog2.pop %v1018
    %v1020 = vmul.f32 %v1019, 0.6931472
    %v1021 = vmul.f32 -0.5, %v822
    %v1022 = vadd.f32 %v1021, 1.0
    %v1023 = vmul.f32 %v1022, %v822
    %v1024 = vand.u32 2147483647, %v822
    %vm1025 = vcmp.lt.f32.partialorder %v1024, 0.0004427343
    %v1026 = vsel %vm1025, %v1023, %v1020
    %v1027 = vadd.f32 %v824, 1.0
    %v1028 = vlog2.pop %v1027
    %v1029 = vmul.f32 %v1028, 0.6931472
    %v1030 = vmul.f32 -0.5, %v824
    %v1031 = vadd.f32 %v1030, 1.0
    %v1032 = vmul.f32 %v1031, %v824
    %v1033 = vand.u32 2147483647, %v824
    %vm1034 = vcmp.lt.f32.partialorder %v1033, 0.0004427343
    %v1035 = vsel %vm1034, %v1032, %v1029
    %v1036 = vadd.f32 %v826, 1.0
    %v1037 = vlog2.pop %v1036
    %v1038 = vmul.f32 %v1037, 0.6931472
    %v1039 = vmul.f32 -0.5, %v826
    %v1040 = vadd.f32 %v1039, 1.0
    %v1041 = vmul.f32 %v1040, %v826
    %v1042 = vand.u32 2147483647, %v826
    %vm1043 = vcmp.lt.f32.partialorder %v1042, 0.0004427343
    %v1044 = vsel %vm1043, %v1041, %v1038
    %v1045 = vadd.f32 %v828, 1.0
    %v1046 = vlog2.pop %v1045
    %v1047 = vmul.f32 %v1046, 0.6931472
    %v1048 = vmul.f32 -0.5, %v828
    %v1049 = vadd.f32 %v1048, 1.0
    %v1050 = vmul.f32 %v1049, %v828
    %v1051 = vand.u32 2147483647, %v828
    %vm1052 = vcmp.lt.f32.partialorder %v1051, 0.0004427343
    %v1053 = vsel %vm1052, %v1050, %v1047
    %v1054 = vadd.f32 %v830, 1.0
    %v1055 = vlog2.pop %v1054
    %v1056 = vmul.f32 %v1055, 0.6931472
    %v1057 = vmul.f32 -0.5, %v830
    %v1058 = vadd.f32 %v1057, 1.0
    %v1059 = vmul.f32 %v1058, %v830
    %v1060 = vand.u32 2147483647, %v830
    %vm1061 = vcmp.lt.f32.partialorder %v1060, 0.0004427343
    %v1062 = vsel %vm1061, %v1059, %v1056
    %v1063 = vadd.f32 %v832, 1.0
    %v1064 = vlog2.pop %v1063
    %v1065 = vmul.f32 %v1064, 0.6931472
    %v1066 = vmul.f32 -0.5, %v832
    %v1067 = vadd.f32 %v1066, 1.0
    %v1068 = vmul.f32 %v1067, %v832
    %v1069 = vand.u32 2147483647, %v832
    %vm1070 = vcmp.lt.f32.partialorder %v1069, 0.0004427343
    %v1071 = vsel %vm1070, %v1068, %v1065
    %v1072 = vadd.f32 %v834, 1.0
    %v1073 = vlog2.pop %v1072
    %v1074 = vmul.f32 %v1073, 0.6931472
    %v1075 = vmul.f32 -0.5, %v834
    %v1076 = vadd.f32 %v1075, 1.0
    %v1077 = vmul.f32 %v1076, %v834
    %v1078 = vand.u32 2147483647, %v834
    %vm1079 = vcmp.lt.f32.partialorder %v1078, 0.0004427343
    %v1080 = vsel %vm1079, %v1077, %v1074
    %v1081 = vadd.f32 %v836, 1.0
    %v1082 = vlog2.pop %v1081
    %v1083 = vmul.f32 %v1082, 0.6931472
    %v1084 = vmul.f32 -0.5, %v836
    %v1085 = vadd.f32 %v1084, 1.0
    %v1086 = vmul.f32 %v1085, %v836
    %v1087 = vand.u32 2147483647, %v836
    %vm1088 = vcmp.lt.f32.partialorder %v1087, 0.0004427343
    %v1089 = vsel %vm1088, %v1086, %v1083
    %v1090 = vadd.f32 %v838, 1.0
    %v1091 = vlog2.pop %v1090
    %v1092 = vmul.f32 %v1091, 0.6931472
    %v1093 = vmul.f32 -0.5, %v838
    %v1094 = vadd.f32 %v1093, 1.0
    %v1095 = vmul.f32 %v1094, %v838
    %v1096 = vand.u32 2147483647, %v838
    %vm1097 = vcmp.lt.f32.partialorder %v1096, 0.0004427343
    %v1098 = vsel %vm1097, %v1095, %v1092
    %v1099 = vadd.f32 %v840, 1.0
    %v1100 = vlog2.pop %v1099
    %v1101 = vmul.f32 %v1100, 0.6931472
    %v1102 = vmul.f32 -0.5, %v840
    %v1103 = vadd.f32 %v1102, 1.0
    %v1104 = vmul.f32 %v1103, %v840
    %v1105 = vand.u32 2147483647, %v840
    %vm1106 = vcmp.lt.f32.partialorder %v1105, 0.0004427343
    %v1107 = vsel %vm1106, %v1104, %v1101
    %v1108 = vadd.f32 %v842, 1.0
    %v1109 = vlog2.pop %v1108
    %v1110 = vmul.f32 %v1109, 0.6931472
    %v1111 = vmul.f32 -0.5, %v842
    %v1112 = vadd.f32 %v1111, 1.0
    %v1113 = vmul.f32 %v1112, %v842
    %v1114 = vand.u32 2147483647, %v842
    %vm1115 = vcmp.lt.f32.partialorder %v1114, 0.0004427343
    %v1116 = vsel %vm1115, %v1113, %v1110
    %v1117 = vadd.f32 %v844, 1.0
    %v1118 = vlog2.pop %v1117
    %v1119 = vmul.f32 %v1118, 0.6931472
    %v1120 = vmul.f32 -0.5, %v844
    %v1121 = vadd.f32 %v1120, 1.0
    %v1122 = vmul.f32 %v1121, %v844
    %v1123 = vand.u32 2147483647, %v844
    %vm1124 = vcmp.lt.f32.partialorder %v1123, 0.0004427343
    %v1125 = vsel %vm1124, %v1122, %v1119
    %v1126 = vadd.f32 %v846, 1.0
    %v1127 = vlog2.pop %v1126
    %v1128 = vmul.f32 %v1127, 0.6931472
    %v1129 = vmul.f32 -0.5, %v846
    %v1130 = vadd.f32 %v1129, 1.0
    %v1131 = vmul.f32 %v1130, %v846
    %v1132 = vand.u32 2147483647, %v846
    %vm1133 = vcmp.lt.f32.partialorder %v1132, 0.0004427343
    %v1134 = vsel %vm1133, %v1131, %v1128
    %v1135 = vadd.f32 %v687, %v855
    %v1136 = vadd.f32 %v688, %v864
    %v1137 = vadd.f32 %v689, %v873
    %v1138 = vadd.f32 %v690, %v882
    %v1139 = vadd.f32 %v691, %v891
    %v1140 = vadd.f32 %v692, %v900
    %v1141 = vadd.f32 %v693, %v909
    %v1142 = vadd.f32 %v694, %v918
    %v1143 = vadd.f32 %v695, %v927
    %v1144 = vadd.f32 %v696, %v936
    %v1145 = vadd.f32 %v697, %v945
    %v1146 = vadd.f32 %v698, %v954
    %v1147 = vadd.f32 %v699, %v963
    %v1148 = vadd.f32 %v700, %v972
    %v1149 = vadd.f32 %v701, %v981
    %v1150 = vadd.f32 %v702, %v990
    %v1151 = vadd.f32 %v703, %v999
    %v1152 = vadd.f32 %v704, %v1008
    %v1153 = vadd.f32 %v705, %v1017
    %v1154 = vadd.f32 %v706, %v1026
    %v1155 = vadd.f32 %v707, %v1035
    %v1156 = vadd.f32 %v708, %v1044
    %v1157 = vadd.f32 %v709, %v1053
    %v1158 = vadd.f32 %v710, %v1062
    %v1159 = vadd.f32 %v711, %v1071
    %v1160 = vadd.f32 %v712, %v1080
    %v1161 = vadd.f32 %v713, %v1089
    %v1162 = vadd.f32 %v714, %v1098
    %v1163 = vadd.f32 %v715, %v1107
    %v1164 = vadd.f32 %v716, %v1116
    %v1165 = vadd.f32 %v717, %v1125
    %v1166 = vadd.f32 %v718, %v1134
    %s1167 = smul.u32 0, 16
    %v1168 = vlaneseq
    %v1169 = vshrl.u32 %v1168, 7
    %v1170 = vadd.s32 %v1169, 8
    %v1171 = vstv %s1167
    %v1172 = vadd.s32 %v1171, %v1169
    %v1173 = vadd.s32 %v1171, %v1170
    %vm1174 = vcmp.lt.s32.totalorder %v1172, 10
    %vm1175 = vcmp.lt.s32.totalorder %v1173, 10
    %v1176 = vsel %vm1174, 1, 0
    %v1177 = vsel %vm1175, 1, 0
    %vm1178 = vcmp.eq.s32.totalorder %v1176, 1
    %vm1179 = vcmp.eq.s32.totalorder %v1177, 1
    %v1212 = vrot.slane %v1137, 7
    %vm1213 = vcmask 1041409
    %v1214 = vsel %vm1213, %v1212, %v1135
    %v1215 = vrot.slane %v1139, 6
    %vm1216 = vcmask 1042434
    %v1217 = vsel %vm1216, %v1215, %v1214
    %v1218 = vrot.slane %v1141, 5
    %vm1219 = vcmask 1043459
    %v1220 = vsel %vm1219, %v1218, %v1217
    %v1221 = vrot.slane %v1143, 4
    %vm1222 = vcmask 1044484
    %v1223 = vsel %vm1222, %v1221, %v1220
    %v1224 = vrot.slane %v1145, 3
    %vm1225 = vcmask 1045509
    %v1226 = vsel %vm1225, %v1224, %v1223
    %v1227 = vrot.slane %v1147, 2
    %vm1228 = vcmask 1046534
    %v1229 = vsel %vm1228, %v1227, %v1226
    %v1230 = vrot.slane %v1149, 1
    %vm1231 = vcmask 1047559
    %v1232 = vsel %vm1231, %v1230, %v1229
    %v1233 = vrot.slane %v1138, 7
    %v1234 = vsel %vm1213, %v1233, %v1136
    %v1235 = vrot.slane %v1140, 6
    %v1236 = vsel %vm1216, %v1235, %v1234
    %v1237 = vrot.slane %v1142, 5
    %v1238 = vsel %vm1219, %v1237, %v1236
    %v1239 = vrot.slane %v1144, 4
    %v1240 = vsel %vm1222, %v1239, %v1238
    %v1241 = vrot.slane %v1146, 3
    %v1242 = vsel %vm1225, %v1241, %v1240
    %v1243 = vrot.slane %v1148, 2
    %v1244 = vsel %vm1228, %v1243, %v1242
    %v1245 = vrot.slane %v1150, 1
    %v1246 = vsel %vm1231, %v1245, %v1244
    %v1247 = vrot.slane %v1153, 7
    %v1248 = vsel %vm1213, %v1247, %v1151
    %v1249 = vrot.slane %v1155, 6
    %v1250 = vsel %vm1216, %v1249, %v1248
    %v1251 = vrot.slane %v1157, 5
    %v1252 = vsel %vm1219, %v1251, %v1250
    %v1253 = vrot.slane %v1159, 4
    %v1254 = vsel %vm1222, %v1253, %v1252
    %v1255 = vrot.slane %v1161, 3
    %v1256 = vsel %vm1225, %v1255, %v1254
    %v1257 = vrot.slane %v1163, 2
    %v1258 = vsel %vm1228, %v1257, %v1256
    %v1259 = vrot.slane %v1165, 1
    %v1260 = vsel %vm1231, %v1259, %v1258
    %v1261 = vrot.slane %v1154, 7
    %v1262 = vsel %vm1213, %v1261, %v1152
    %v1263 = vrot.slane %v1156, 6
    %v1264 = vsel %vm1216, %v1263, %v1262
    %v1265 = vrot.slane %v1158, 5
    %v1266 = vsel %vm1219, %v1265, %v1264
    %v1267 = vrot.slane %v1160, 4
    %v1268 = vsel %vm1222, %v1267, %v1266
    %v1269 = vrot.slane %v1162, 3
    %v1270 = vsel %vm1225, %v1269, %v1268
    %v1271 = vrot.slane %v1164, 2
    %v1272 = vsel %vm1228, %v1271, %v1270
    %v1273 = vrot.slane %v1166, 1
    %v1274 = vsel %vm1231, %v1273, %v1272
    %v1279 = vsel %vm1178, %v1232, 0.0
    %v1280 = vsel %vm1178, %v1246, 0.0
    %v1281 = vsel %vm1179, %v1260, 0.0
    %v1282 = vsel %vm1179, %v1274, 0.0
    %v1283 = vld [vmem:[#allocation2] sm:$0xff]
    %v1284 = vld [vmem:[#allocation2 + $0x8] sm:$0xff]
    %v1285 = vld [vmem:[#allocation2 + $0x10] sm:$0xff]
    %v1286 = vld [vmem:[#allocation2 + $0x18] sm:$0xff]
    %v1287 = vadd.f32 %v1283, %v1279
    %v1288 = vadd.f32 %v1284, %v1280
    %v1289 = vadd.f32 %v1285, %v1281
    %v1290 = vadd.f32 %v1286, %v1282
    %1291 = vst [vmem:[#allocation2] sm:$0xff] %v1287
    %1292 = vst [vmem:[#allocation2 + $0x8] sm:$0xff] %v1288
    %1293 = vst [vmem:[#allocation2 + $0x10] sm:$0xff] %v1289
    %1294 = vst [vmem:[#allocation2 + $0x18] sm:$0xff] %v1290
    // Predicated region
    $region22: #{tpu_custom_call.1} parent=1 // pred_check
      %p1295 = pneg %p31
    $region23: #{tpu_custom_call.1} parent=1 // pred_check_branch
      %1297 = sbr.rel (%p1295) target = $region25
    $region24: #{tpu_custom_call.1} parent=1 // pred_region
      %v1298 = vld [vmem:[#allocation2] sm:$0xff]
      %v1299 = vld [vmem:[#allocation2 + $0x8] sm:$0xff]
      %v1300 = vld [vmem:[#allocation2 + $0x10] sm:$0xff]
      %v1301 = vld [vmem:[#allocation2 + $0x18] sm:$0xff]
      %v1302 = vadd.f32 %v1298, %v1299
      %v1303 = vadd.f32 %v1302, %v1300
      %v1304 = vadd.f32 %v1303, %v1301
      %1305 = vadd.xlane.f32.xlu0 %v1304
      %v1306 = vpop.xlane.xlu0 %1305
      %v1307 = vrot.slane %v1306, 4
      %v1308 = vadd.f32 %v1306, %v1307
      %v1309 = vrot.slane %v1308, 2
      %v1310 = vadd.f32 %v1308, %v1309
      %v1311 = vrot.slane %v1310, 1
      %v1312 = vadd.f32 %v1310, %v1311
      %s1313 = vtos %v1312
      %v1314 = vstv %s1313
      %v1315 = vmul.f32 %v1314, 0.000390625
      %vm1316 = vcmask 0
      %1317 = vst.msk [vmem:[#allocation6] sm:$0x1] %vm1316, %v1315
    $region25: #{tpu_custom_call.1} parent=1 // pred_fallthru
      _
    // Predicated region
    $region26: #{tpu_custom_call.1} parent=1 // pred_check
      _
    $region27: #{tpu_custom_call.1} parent=1 // pred_check_branch
      %1319 = sbr.rel (0) target = $region29
    $region28: #{tpu_custom_call.1} parent=1 // pred_region
      %1321 = vsyncadd [#allocation5], 0
      %s1323 = sshll.u32 [#allocation6], 4
      %s1324 = int_to_ptr.vmem [resolvable:$true] %s1323
      %s1325 = sshll.u32 %s3, 4
      %s1326 = int_to_ptr.hbm [resolvable:$true] %s1325
      %1328 = dma.vmem_to_hbm [thread:$0]  %s1324, 16, %s1326, [#allocation5]
    $region29: #{tpu_custom_call.1} parent=1 // pred_fallthru
      _
    // Predicated region
    $region30: #{tpu_custom_call.1} parent=1 // pred_check
      _
    $region31: #{tpu_custom_call.1} parent=1 // pred_check_branch
      %1330 = sbr.rel (0) target = $region33
    $region32: #{tpu_custom_call.1} parent=1 // pred_region
      %1332 = dma.done [#allocation5], 16
    $region33: #{tpu_custom_call.1} parent=1 // pred_fallthru
      _
    %1333 = vsyncpa [#allocation4], 1
    %1334 = vsyncpa [#allocation5], 1

</llo_original>
